<compile_context>
chip_gen: v6e
topology: v6e:2x2x1
jax: 0.10.0
libtpu: 0.0.40
codegen_flags: <defaults>
</compile_context>

<pallas_src>
import functools

import jax
import jax.numpy as jnp
from jax import lax
from jax.experimental import pallas as pl
from jax.experimental.pallas import tpu as pltpu


# ----------------------------------------------------------------------------
# Kernel A: 1x1 conv (W @ x) + per-channel sum / sum-of-squares for the
# BatchNorm batch statistics.  Grid = (N, spatial_tiles); stats accumulate in
# VMEM scratch and are written once per sample (epilogue) into per-sample
# slots, so axis 0 can be megacore-parallel while axis 1 is the reduction.
# ----------------------------------------------------------------------------
def _conv_stats_kernel(x_ref, w_ref, sum_ref, sumsq_ref, sum_acc, sumsq_acc):
    s = pl.program_id(1)

    @pl.when(s == 0)
    def _():
        sum_acc[...] = jnp.zeros_like(sum_acc)
        sumsq_acc[...] = jnp.zeros_like(sumsq_acc)

    # (C_out, C_in) @ (C_in, TS) on the MXU, f32 accumulation.
    y = jnp.dot(w_ref[...], x_ref[0], preferred_element_type=jnp.float32)
    sum_acc[...] += jnp.sum(y, axis=-1, keepdims=True)          # (C_out, 1)
    sumsq_acc[...] += jnp.sum(y * y, axis=-1, keepdims=True)    # (C_out, 1)

    @pl.when(s == pl.num_programs(1) - 1)
    def _():
        sum_ref[0] = sum_acc[...]
        sumsq_ref[0] = sumsq_acc[...]


# ----------------------------------------------------------------------------
# Kernel B: recompute the 1x1 conv and fuse BatchNorm affine + ReLU6.
# Output block is (1, C_out, TS) -> lane dimension is the (large) spatial dim.
# ----------------------------------------------------------------------------
def _conv_bn_relu6_kernel(x_ref, w_ref, scale_ref, shift_ref, o_ref):
    y = jnp.dot(w_ref[...], x_ref[0], preferred_element_type=jnp.float32)
    out = y * scale_ref[...] + shift_ref[...]        # per-channel affine (f32)
    o_ref[0] = jnp.clip(out, 0.0, 6.0).astype(o_ref.dtype)


def conv1x1_block_forward(x, weight, gamma, beta, *, eps=1e-5, padding=1,
                          tile_spatial=1024, compute_dtype=jnp.bfloat16):
    """Forward pass of Conv1x1Block (training-mode BatchNorm statistics).

    x:      (N, C_in, H, W) float32, NCHW (PyTorch convention)
    weight: (C_out, C_in, 1, 1)
    gamma, beta: (C_out,)  BatchNorm weight / bias
    Returns (N, C_out, H + 2*padding, W + 2*padding) float32.
    """
    # TODO(synk): stride != 1 is not implemented (module default is stride=1).
    N, C_in, H, W = x.shape
    C_out = weight.shape[0]
    Ho, Wo = H + 2 * padding, W + 2 * padding
    S = Ho * Wo

    itemsize = jnp.dtype(compute_dtype).itemsize

    # ---- spatial (lane) tiling ----------------------------------------------
    # Pick the smallest multiple of 128 covering S when it fits the cap (single
    # tile per sample, tail waste < 128); otherwise tile at the cap.  Shrink if
    # the double-buffered working set would not fit comfortably in VMEM.
    cap = max(128, (int(tile_spatial) // 128) * 128)
    if S <= 128:
        ts = S                                    # tiny images: one exact block
    else:
        s_r128 = ((S + 127) // 128) * 128
        ts = s_r128 if s_r128 <= cap else cap

    def _footprint(t):
        return (2 * C_in * t * itemsize           # x blocks (double-buffered)
                + 2 * C_out * t * 4               # out blocks (double-buffered)
                + C_out * t * 4                   # f32 matmul temporary
                + 2 * C_out * C_in * itemsize     # weight
                + (2 << 20))                      # slack

    while ts > 128 and _footprint(ts) > (40 << 20):
        ts = max(128, ts - 128)

    grid_s = pl.cdiv(S, ts)
    S_pad = grid_s * ts                 # input padded so reads stay in-bounds
    grid = (N, grid_s)

    # ---- prepare inputs (one cheap fused pass over x, the smallest tensor) --
    # Conv2d(1x1, padding=1, bias=False) == zero-pad x, then 1x1 conv.  The
    # zero ring and the S_pad tail contribute exactly 0 to sums / sum-of-
    # squares, so the BN statistics stay exact (only the element count matters,
    # and that is computed analytically below).
    xp = jnp.pad(x, ((0, 0), (0, 0), (padding, padding), (padding, padding)))
    xp = xp.reshape(N, C_in, S)
    if S_pad > S:
        xp = jnp.pad(xp, ((0, 0), (0, 0), (0, S_pad - S)))
    xp = xp.astype(compute_dtype)
    wm = weight.reshape(C_out, C_in).astype(compute_dtype)

    vmem_limit = int(min(max(_footprint(ts) + (8 << 20), 32 << 20), 48 << 20))

    w_bytes = C_out * C_in * itemsize
    x_bytes = N * C_in * S_pad * itemsize
    matmul_flops = 2 * N * S_pad * C_in * C_out

    # ---- pass A: conv + BN batch statistics (no conv output materialized) ---
    ch_sum, ch_sumsq = pl.pallas_call(
        _conv_stats_kernel,
        out_shape=(jax.ShapeDtypeStruct((N, C_out, 1), jnp.float32),
                   jax.ShapeDtypeStruct((N, C_out, 1), jnp.float32)),
        grid=grid,
        in_specs=[
            pl.BlockSpec((1, C_in, ts), lambda n, s: (n, 0, s)),
            pl.BlockSpec((C_out, C_in), lambda n, s: (0, 0)),
        ],
        out_specs=(
            pl.BlockSpec((1, C_out, 1), lambda n, s: (n, 0, 0)),
            pl.BlockSpec((1, C_out, 1), lambda n, s: (n, 0, 0)),
        ),
        scratch_shapes=[pltpu.VMEM((C_out, 1), jnp.float32),
                        pltpu.VMEM((C_out, 1), jnp.float32)],
        compiler_params=pltpu.CompilerParams(
            dimension_semantics=("parallel", "arbitrary"),
            vmem_limit_bytes=vmem_limit),
        cost_estimate=pl.CostEstimate(
            flops=matmul_flops + 3 * N * S_pad * C_out,
            transcendentals=0,
            bytes_accessed=x_bytes + w_bytes + 2 * N * C_out * 4),
    )(xp, wm)

    # ---- BN statistics -> per-channel scale / shift (training-mode BN) ------
    # NOTE: E[y^2]-E[y]^2 in f32; clamped to >=0 to guard against cancellation.
    m_total = float(N * Ho * Wo)            # true conv-output count per channel
    s1 = jnp.sum(ch_sum[:, :, 0], axis=0)   # (C_out,)
    s2 = jnp.sum(ch_sumsq[:, :, 0], axis=0)
    mean = s1 / m_total
    var = jnp.maximum(s2 / m_total - mean * mean, 0.0)   # biased (training BN)
    inv_std = lax.rsqrt(var + eps)
    scale = gamma.astype(jnp.float32) * inv_std
    shift = beta.astype(jnp.float32) - mean * scale

    # ---- pass B: conv (recomputed) + BN affine + ReLU6, padded output -------
    out_flat = pl.pallas_call(
        _conv_bn_relu6_kernel,
        out_shape=jax.ShapeDtypeStruct((N, C_out, S), jnp.float32),
        grid=grid,
        in_specs=[
            pl.BlockSpec((1, C_in, ts), lambda n, s: (n, 0, s)),
            pl.BlockSpec((C_out, C_in), lambda n, s: (0, 0)),
            pl.BlockSpec((C_out, 1), lambda n, s: (0, 0)),
            pl.BlockSpec((C_out, 1), lambda n, s: (0, 0)),
        ],
        out_specs=pl.BlockSpec((1, C_out, ts), lambda n, s: (n, 0, s)),
        compiler_params=pltpu.CompilerParams(
            dimension_semantics=("parallel", "parallel"),
            vmem_limit_bytes=vmem_limit),
        cost_estimate=pl.CostEstimate(
            flops=matmul_flops + 2 * N * S_pad * C_out,
            transcendentals=0,
            bytes_accessed=x_bytes + w_bytes + N * C_out * S * 4),
    )(xp, wm, scale.reshape(C_out, 1), shift.reshape(C_out, 1))

    # Free (metadata-only) reshape: (N, C_out, Ho*Wo) -> (N, C_out, Ho, Wo);
    # the padded ring is already part of the kernel output.
    return out_flat.reshape(N, C_out, Ho, Wo)


# ----------------------------------------------------------------------------
# Pure-JAX reference (no torch).
# ----------------------------------------------------------------------------
def _ref_forward(x, weight, gamma, beta, eps=1e-5, padding=1):
    C_out, C_in = weight.shape[0], weight.shape[1]
    y = jnp.einsum("nchw,oc->nohw", x, weight.reshape(C_out, C_in))
    y = jnp.pad(y, ((0, 0), (0, 0), (padding, padding), (padding, padding)))
    mean = y.mean(axis=(0, 2, 3), keepdims=True)
    var = y.var(axis=(0, 2, 3), keepdims=True)    # biased, matches training BN
    yn = (y - mean) / jnp.sqrt(var + eps)
    yn = yn * gamma.reshape(1, -1, 1, 1) + beta.reshape(1, -1, 1, 1)
    return jnp.clip(yn, 0.0, 6.0)


if __name__ == "__main__":
    N, C_in, C_out, H, W = 2, 4, 8, 16, 16

    key = jax.random.PRNGKey(0)
    kx, kw, kg, kb = jax.random.split(key, 4)
    x = jax.random.normal(kx, (N, C_in, H, W), dtype=jnp.float32)
    weight = 0.1 * jax.random.normal(kw, (C_out, C_in, 1, 1), dtype=jnp.float32)
    gamma = 1.0 + 0.1 * jax.random.normal(kg, (C_out,), dtype=jnp.float32)
    beta = 0.1 * jax.random.normal(kb, (C_out,), dtype=jnp.float32)

    ref = _ref_forward(x, weight, gamma, beta)

    # f32 compute path: tight correctness check of layout / indexing / stats.
    fwd_f32 = jax.jit(functools.partial(conv1x1_block_forward,
                                        compute_dtype=jnp.float32))
    out_f32 = fwd_f32(x, weight, gamma, beta)
    jax.block_until_ready(out_f32)
    assert out_f32.shape == (N, C_out, H + 2, W + 2), out_f32.shape
    assert jnp.allclose(out_f32, ref, atol=1e-3, rtol=1e-3), (
        "f32 mismatch, max abs err = "
        + str(float(jnp.max(jnp.abs(out_f32 - ref)))))

    # bf16 MXU-input path (default / perf path): looser numeric tolerance.
    fwd_bf16 = jax.jit(functools.partial(conv1x1_block_forward,
                                         compute_dtype=jnp.bfloat16))
    out_bf16 = fwd_bf16(x, weight, gamma, beta)
    jax.block_until_ready(out_bf16)
    assert out_bf16.shape == (N, C_out, H + 2, W + 2), out_bf16.shape
    assert jnp.allclose(out_bf16, ref, atol=6e-2, rtol=6e-2), (
        "bf16 mismatch, max abs err = "
        + str(float(jnp.max(jnp.abs(out_bf16 - ref)))))

    print("KERNEL_OK")
</pallas_src>

<mosaic_0001>
module attributes {stable_mosaic.version = 11 : i64} {
  func.func @_conv_stats_kernel(%arg0: i32, %arg1: i32, %arg2: memref<1x4x384xf32, #tpu.memory_space<vmem>>, %arg3: memref<8x4xf32, #tpu.memory_space<vmem>>, %arg4: memref<1x8x1xf32, #tpu.memory_space<vmem>>, %arg5: memref<1x8x1xf32, #tpu.memory_space<vmem>>, %arg6: memref<8x1xf32, #tpu.memory_space<vmem>>, %arg7: memref<8x1xf32, #tpu.memory_space<vmem>>) attributes {dimension_semantics = [#tpu.dimension_semantics<parallel>, #tpu.dimension_semantics<arbitrary>], iteration_bounds = array<i64: 2, 1>, scalar_prefetch = 0 : i64, scratch_operands = 2 : i64, tpu.core_type = #tpu.core_type<tc>, window_params = [{transform_indices = @transform_0, window_bounds = array<i64: 1, 4, 384>}, {pipeline_mode = #tpu.pipeline_mode<synchronous>, transform_indices = @transform_1, window_bounds = array<i64: 8, 4>}, {transform_indices = @transform_2, window_bounds = array<i64: 1, 8, 1>}, {transform_indices = @transform_3, window_bounds = array<i64: 1, 8, 1>}]} {
    %c0_i32 = arith.constant 0 : i32
    %0 = arith.cmpi eq, %arg1, %c0_i32 : i32
    %1 = arith.extui %0 : i1 to i32
    %c0_i32_0 = arith.constant 0 : i32
    %2 = arith.cmpi ne, %1, %c0_i32_0 : i32
    scf.if %2 {
      %cst_17 = arith.constant 0.000000e+00 : f32
      %21 = vector.broadcast %cst_17 : f32 to vector<8x1xf32>
      %c0_18 = arith.constant 0 : index
      %c0_19 = arith.constant 0 : index
      %22 = vector.load %arg6[%c0_18, %c0_19] : memref<8x1xf32, #tpu.memory_space<vmem>>, vector<8x1xf32>
      tpu.vector_store %arg6[%c0_18, %c0_19], %21 {strides = array<i32>} : memref<8x1xf32, #tpu.memory_space<vmem>>, vector<8x1xf32>,
      %cst_20 = arith.constant 0.000000e+00 : f32
      %23 = vector.broadcast %cst_20 : f32 to vector<8x1xf32>
      %c0_21 = arith.constant 0 : index
      %c0_22 = arith.constant 0 : index
      %24 = vector.load %arg7[%c0_21, %c0_22] : memref<8x1xf32, #tpu.memory_space<vmem>>, vector<8x1xf32>
      tpu.vector_store %arg7[%c0_21, %c0_22], %23 {strides = array<i32>} : memref<8x1xf32, #tpu.memory_space<vmem>>, vector<8x1xf32>,
    } else {
    }
    %c0 = arith.constant 0 : index
    %c0_1 = arith.constant 0 : index
    %3 = vector.load %arg3[%c0, %c0_1] : memref<8x4xf32, #tpu.memory_space<vmem>>, vector<8x4xf32>
    %c0_2 = arith.constant 0 : index
    %c0_3 = arith.constant 0 : index
    %c0_4 = arith.constant 0 : index
    %4 = vector.load %arg2[%c0_2, %c0_3, %c0_4] : memref<1x4x384xf32, #tpu.memory_space<vmem>>, vector<1x4x384xf32>
    %5 = vector.shape_cast %4 : vector<1x4x384xf32> to vector<4x384xf32>
    %cst = arith.constant dense<0.000000e+00> : vector<8x384xf32>
    %6 = tpu.matmul %3, %5, %cst {dimension_numbers = #tpu.dot_dimension_numbers<[1], [0], [0], [1], [0, 0, 1, 1], [], []>} : vector<8x4xf32>, vector<4x384xf32>, vector<8x384xf32> -> vector<8x384xf32>
    %c0_5 = arith.constant 0 : index
    %c0_6 = arith.constant 0 : index
    %7 = vector.load %arg6[%c0_5, %c0_6] : memref<8x1xf32, #tpu.memory_space<vmem>>, vector<8x1xf32>
    %cst_7 = arith.constant dense<0.000000e+00> : vector<8xf32>
    %8 = vector.multi_reduction <add>, %6, %cst_7 [1] : vector<8x384xf32> to vector<8xf32>
    %9 = vector.shape_cast %8 : vector<8xf32> to vector<8x1xf32>
    %10 = arith.addf %7, %9 : vector<8x1xf32>
    %c0_8 = arith.constant 0 : index
    %c0_9 = arith.constant 0 : index
    %11 = vector.load %arg6[%c0_8, %c0_9] : memref<8x1xf32, #tpu.memory_space<vmem>>, vector<8x1xf32>
    tpu.vector_store %arg6[%c0_8, %c0_9], %10 {strides = array<i32>} : memref<8x1xf32, #tpu.memory_space<vmem>>, vector<8x1xf32>,
    %c0_10 = arith.constant 0 : index
    %c0_11 = arith.constant 0 : index
    %12 = vector.load %arg7[%c0_10, %c0_11] : memref<8x1xf32, #tpu.memory_space<vmem>>, vector<8x1xf32>
    %13 = arith.mulf %6, %6 : vector<8x384xf32>
    %cst_12 = arith.constant dense<0.000000e+00> : vector<8xf32>
    %14 = vector.multi_reduction <add>, %13, %cst_12 [1] : vector<8x384xf32> to vector<8xf32>
    %15 = vector.shape_cast %14 : vector<8xf32> to vector<8x1xf32>
    %16 = arith.addf %12, %15 : vector<8x1xf32>
    %c0_13 = arith.constant 0 : index
    %c0_14 = arith.constant 0 : index
    %17 = vector.load %arg7[%c0_13, %c0_14] : memref<8x1xf32, #tpu.memory_space<vmem>>, vector<8x1xf32>
    tpu.vector_store %arg7[%c0_13, %c0_14], %16 {strides = array<i32>} : memref<8x1xf32, #tpu.memory_space<vmem>>, vector<8x1xf32>,
    %c0_i32_15 = arith.constant 0 : i32
    %18 = arith.cmpi eq, %arg1, %c0_i32_15 : i32
    %19 = arith.extui %18 : i1 to i32
    %c0_i32_16 = arith.constant 0 : i32
    %20 = arith.cmpi ne, %19, %c0_i32_16 : i32
    scf.if %20 {
      %c0_17 = arith.constant 0 : index
      %c0_18 = arith.constant 0 : index
      %21 = vector.load %arg6[%c0_17, %c0_18] : memref<8x1xf32, #tpu.memory_space<vmem>>, vector<8x1xf32>
      %c0_19 = arith.constant 0 : index
      %c0_20 = arith.constant 0 : index
      %c0_21 = arith.constant 0 : index
      %22 = vector.load %arg4[%c0_19, %c0_20, %c0_21] : memref<1x8x1xf32, #tpu.memory_space<vmem>>, vector<1x8x1xf32>
      %23 = vector.shape_cast %22 : vector<1x8x1xf32> to vector<8x1xf32>
      %24 = vector.shape_cast %21 : vector<8x1xf32> to vector<1x8x1xf32>
      tpu.vector_store %arg4[%c0_19, %c0_20, %c0_21], %24 {strides = array<i32>} : memref<1x8x1xf32, #tpu.memory_space<vmem>>, vector<1x8x1xf32>,
      %c0_22 = arith.constant 0 : index
      %c0_23 = arith.constant 0 : index
      %25 = vector.load %arg7[%c0_22, %c0_23] : memref<8x1xf32, #tpu.memory_space<vmem>>, vector<8x1xf32>
      %c0_24 = arith.constant 0 : index
      %c0_25 = arith.constant 0 : index
      %c0_26 = arith.constant 0 : index
      %26 = vector.load %arg5[%c0_24, %c0_25, %c0_26] : memref<1x8x1xf32, #tpu.memory_space<vmem>>, vector<1x8x1xf32>
      %27 = vector.shape_cast %26 : vector<1x8x1xf32> to vector<8x1xf32>
      %28 = vector.shape_cast %25 : vector<8x1xf32> to vector<1x8x1xf32>
      tpu.vector_store %arg5[%c0_24, %c0_25, %c0_26], %28 {strides = array<i32>} : memref<1x8x1xf32, #tpu.memory_space<vmem>>, vector<1x8x1xf32>,
    } else {
    }
    return
  }
  func.func @transform_0(%arg0: i32, %arg1: i32) -> (i32, i32, i32) {
    %c0_i32 = arith.constant 0 : i32
    %c0_i32_0 = arith.constant 0 : i32
    return %arg0, %c0_i32, %arg1 : i32, i32, i32
  }
  func.func @transform_1(%arg0: i32, %arg1: i32) -> (i32, i32) {
    %c0_i32 = arith.constant 0 : i32
    %c0_i32_0 = arith.constant 0 : i32
    %c0_i32_1 = arith.constant 0 : i32
    return %c0_i32, %c0_i32_0 : i32, i32
  }
  func.func @transform_2(%arg0: i32, %arg1: i32) -> (i32, i32, i32) {
    %c0_i32 = arith.constant 0 : i32
    %c0_i32_0 = arith.constant 0 : i32
    %c0_i32_1 = arith.constant 0 : i32
    return %arg0, %c0_i32, %c0_i32_0 : i32, i32, i32
  }
  func.func @transform_3(%arg0: i32, %arg1: i32) -> (i32, i32, i32) {
    %c0_i32 = arith.constant 0 : i32
    %c0_i32_0 = arith.constant 0 : i32
    %c0_i32_1 = arith.constant 0 : i32
    return %arg0, %c0_i32, %c0_i32_0 : i32, i32, i32
  }
}

module attributes {stable_mosaic.version = 11 : i64} {
  func.func @_conv_bn_relu6_kernel(%arg0: i32, %arg1: i32, %arg2: memref<1x4x384xf32, #tpu.memory_space<vmem>>, %arg3: memref<8x4xf32, #tpu.memory_space<vmem>>, %arg4: memref<8x1xf32, #tpu.memory_space<vmem>>, %arg5: memref<8x1xf32, #tpu.memory_space<vmem>>, %arg6: memref<1x8x384xf32, #tpu.memory_space<vmem>>) attributes {dimension_semantics = [#tpu.dimension_semantics<parallel>, #tpu.dimension_semantics<parallel>], iteration_bounds = array<i64: 2, 1>, scalar_prefetch = 0 : i64, scratch_operands = 0 : i64, tpu.core_type = #tpu.core_type<tc>, window_params = [{transform_indices = @transform_0, window_bounds = array<i64: 1, 4, 384>}, {pipeline_mode = #tpu.pipeline_mode<synchronous>, transform_indices = @transform_1, window_bounds = array<i64: 8, 4>}, {pipeline_mode = #tpu.pipeline_mode<synchronous>, transform_indices = @transform_2, window_bounds = array<i64: 8, 1>}, {pipeline_mode = #tpu.pipeline_mode<synchronous>, transform_indices = @transform_3, window_bounds = array<i64: 8, 1>}, {transform_indices = @transform_4, window_bounds = array<i64: 1, 8, 384>}]} {
    %c0 = arith.constant 0 : index
    %c0_0 = arith.constant 0 : index
    %0 = vector.load %arg3[%c0, %c0_0] : memref<8x4xf32, #tpu.memory_space<vmem>>, vector<8x4xf32>
    %c0_1 = arith.constant 0 : index
    %c0_2 = arith.constant 0 : index
    %c0_3 = arith.constant 0 : index
    %1 = vector.load %arg2[%c0_1, %c0_2, %c0_3] : memref<1x4x384xf32, #tpu.memory_space<vmem>>, vector<1x4x384xf32>
    %2 = vector.shape_cast %1 : vector<1x4x384xf32> to vector<4x384xf32>
    %cst = arith.constant dense<0.000000e+00> : vector<8x384xf32>
    %3 = tpu.matmul %0, %2, %cst {dimension_numbers = #tpu.dot_dimension_numbers<[1], [0], [0], [1], [0, 0, 1, 1], [], []>} : vector<8x4xf32>, vector<4x384xf32>, vector<8x384xf32> -> vector<8x384xf32>
    %c0_4 = arith.constant 0 : index
    %c0_5 = arith.constant 0 : index
    %4 = vector.load %arg4[%c0_4, %c0_5] : memref<8x1xf32, #tpu.memory_space<vmem>>, vector<8x1xf32>
    %5 = vector.broadcast %4 : vector<8x1xf32> to vector<8x384xf32>
    %6 = arith.mulf %3, %5 : vector<8x384xf32>
    %c0_6 = arith.constant 0 : index
    %c0_7 = arith.constant 0 : index
    %7 = vector.load %arg5[%c0_6, %c0_7] : memref<8x1xf32, #tpu.memory_space<vmem>>, vector<8x1xf32>
    %8 = vector.broadcast %7 : vector<8x1xf32> to vector<8x384xf32>
    %9 = arith.addf %6, %8 : vector<8x384xf32>
    %cst_8 = arith.constant 0.000000e+00 : f32
    %cst_9 = arith.constant 6.000000e+00 : f32
    %10 = vector.broadcast %cst_8 : f32 to vector<8x384xf32>
    %11 = arith.maximumf %10, %9 : vector<8x384xf32>
    %12 = vector.broadcast %cst_9 : f32 to vector<8x384xf32>
    %13 = arith.minimumf %12, %11 : vector<8x384xf32>
    %c0_10 = arith.constant 0 : index
    %c0_11 = arith.constant 0 : index
    %c0_12 = arith.constant 0 : index
    %14 = vector.load %arg6[%c0_10, %c0_11, %c0_12] : memref<1x8x384xf32, #tpu.memory_space<vmem>>, vector<1x8x384xf32>
    %15 = vector.shape_cast %14 : vector<1x8x384xf32> to vector<8x384xf32>
    %16 = vector.shape_cast %13 : vector<8x384xf32> to vector<1x8x384xf32>
    tpu.vector_store %arg6[%c0_10, %c0_11, %c0_12], %16 {strides = array<i32>} : memref<1x8x384xf32, #tpu.memory_space<vmem>>, vector<1x8x384xf32>,
    return
  }
  func.func @transform_0(%arg0: i32, %arg1: i32) -> (i32, i32, i32) {
    %c0_i32 = arith.constant 0 : i32
    %c0_i32_0 = arith.constant 0 : i32
    return %arg0, %c0_i32, %arg1 : i32, i32, i32
  }
  func.func @transform_1(%arg0: i32, %arg1: i32) -> (i32, i32) {
    %c0_i32 = arith.constant 0 : i32
    %c0_i32_0 = arith.constant 0 : i32
    %c0_i32_1 = arith.constant 0 : i32
    return %c0_i32, %c0_i32_0 : i32, i32
  }
  func.func @transform_2(%arg0: i32, %arg1: i32) -> (i32, i32) {
    %c0_i32 = arith.constant 0 : i32
    %c0_i32_0 = arith.constant 0 : i32
    %c0_i32_1 = arith.constant 0 : i32
    return %c0_i32, %c0_i32_0 : i32, i32
  }
  func.func @transform_3(%arg0: i32, %arg1: i32) -> (i32, i32) {
    %c0_i32 = arith.constant 0 : i32
    %c0_i32_0 = arith.constant 0 : i32
    %c0_i32_1 = arith.constant 0 : i32
    return %c0_i32, %c0_i32_0 : i32, i32
  }
  func.func @transform_4(%arg0: i32, %arg1: i32) -> (i32, i32, i32) {
    %c0_i32 = arith.constant 0 : i32
    %c0_i32_0 = arith.constant 0 : i32
    return %arg0, %c0_i32, %arg1 : i32, i32, i32
  }
}

</mosaic_0001>

<llo_original>
// kernel: conv1x1_block_forward.3
$region0: #{conv1x1_block_forward.3}
  #allocation0 [shape = 'u32[]', space=smem, size = 0x4, offset = 0x4, fixed_abs, tag = 'smem constant byte address 0x4 - core index']
  #allocation1 [shape = 'u32[144,128]{1,0:T(1,128)}', space=vmem, size = 0x12000, scoped, tag = 'internal scratch']
  %s0 = inlined_call_operand.vmem [shape: f32[2,4,384], index: 0, kind: input, shape index: {}]
  %s1 = inlined_call_operand.vmem [shape: f32[8,4], index: 1, kind: input, shape index: {}]
  %s2 = inlined_call_operand.vmem [shape: f32[8,1], index: 2, kind: input, shape index: {}]
  %s3 = inlined_call_operand.vmem [shape: f32[8,1], index: 3, kind: input, shape index: {}]
  %s4 = inlined_call_operand.vmem [shape: f32[2,8,324], index: 4, kind: output, shape index: {}]
  %s5 = sld [smem:[#allocation0]]
  $region49: #{conv1x1_block_forward.3} parent=0
    _
  %s7 = ssub.s32 1, %s5
  %s8 = scalar_select 0, %s7, %s5
  loop: start=0, step=1, limit=4
  $region2: #{conv1x1_block_forward.3} parent=0 // loop_pre_header
    _
  $region3: #{conv1x1_block_forward.3} parent=0 // loop_header
    %s10 = sphi 0, %s14
    %p11 = scmp.ge.s32.totalorder %s10, 4
    %s17 = sphi 0, %s29
    %s18 = sphi 0, %s25
    %s19 = sphi 0, %s17
    %s20 = sphi 0, %s18
    %s21 = sphi 0, %s19
    %s22 = sphi 0, %s20
    %s34 = sphi 0, %s36
    %s37 = sphi 0, %s34
    %s38 = sphi 0, %s37
    %s54 = sphi 0, %s38
    %s58 = sphi 0, %s58
    %s60 = sphi 0, %s58
    %s61 = sphi 0, %s60
    %s75 = sphi 0, %s61
    %s79 = sphi 0, %s79
    %s81 = sphi 0, %s79
    %s82 = sphi 0, %s81
    %s96 = sphi 0, %s82
    %s100 = sphi 0, %s100
    %s102 = sphi 0, %s100
    %s103 = sphi 0, %s102
    %s117 = sphi 0, %s103
    %s125 = sphi 0, %s127
    %s128 = sphi 0, %s125
    %s129 = sphi 0, %s128
    %s145 = sphi 0, %s129
  $region4: #{conv1x1_block_forward.3} parent=0 // loop_header_branch
    %13 = sbr.rel (%p11) target = $region8
  $region5: #{conv1x1_block_forward.3} parent=0 // loop_body
    %s15 = ssub.s32 %s10, 1
    %s16 = ssub.s32 %s10, 2
    %s23 = sadd.s32 1, %s18
    %p24 = scmp.ge.s32.totalorder %s23, 1
    %s25 = scalar_select %p24, 0, %s23
    %s26 = sadd.s32 1, %s17
    %s27 = scalar_select %p24, %s26, %s17
    %p28 = scmp.ge.s32.totalorder %s27, 2
    %s29 = scalar_select %p28, 0, %s27
    %s30 = ssub.s32 %s17, %s29
    %s31 = ssub.s32 %s18, %s25
    %s32 = sor.u32 %s30, %s31
    %p33 = scmp.eq.s32.totalorder %s32, 0
    %s35 = sadd.s32 %s34, 1
    %s36 = scalar_select %p33, %s34, %s35
    %p39 = pneg %p33
    %p40 = scmp.eq.s32.totalorder %s10, 1
    %p41 = por %p39, %p40
    %p42 = scmp.ne.s32.totalorder %s34, %s37
    %p43 = scmp.eq.s32.totalorder %s10, 0
    %p44 = por %p42, %p43
    %p45 = scmp.ne.s32.totalorder %s34, %s37
    %p46 = scmp.eq.s32.totalorder %s15, 1
    %p47 = por %p45, %p46
    %p48 = scmp.ne.s32.totalorder %s37, %s38
    %p49 = scmp.eq.s32.totalorder %s15, 0
    %p50 = por %p48, %p49
    %p51 = scmp.ne.s32.totalorder %s37, %s38
    %p52 = scmp.eq.s32.totalorder %s16, 1
    %p53 = por %p51, %p52
    %p55 = scmp.ne.s32.totalorder %s38, %s54
    %p56 = scmp.eq.s32.totalorder %s16, 0
    %p57 = por %p55, %p56
    %s59 = sadd.s32 %s58, 1
    %p62 = scmp.eq.s32.totalorder %s10, 1
    %p63 = scmp.ne.s32.totalorder %s58, %s60
    %p64 = scmp.eq.s32.totalorder %s10, 0
    %p65 = por %p63, %p64
    %p66 = scmp.ne.s32.totalorder %s58, %s60
    %p67 = scmp.eq.s32.totalorder %s15, 1
    %p68 = por %p66, %p67
    %p69 = scmp.ne.s32.totalorder %s60, %s61
    %p70 = scmp.eq.s32.totalorder %s15, 0
    %p71 = por %p69, %p70
    %p72 = scmp.ne.s32.totalorder %s60, %s61
    %p73 = scmp.eq.s32.totalorder %s16, 1
    %p74 = por %p72, %p73
    %p76 = scmp.ne.s32.totalorder %s61, %s75
    %p77 = scmp.eq.s32.totalorder %s16, 0
    %p78 = por %p76, %p77
    %s80 = sadd.s32 %s79, 1
    %p83 = scmp.eq.s32.totalorder %s10, 1
    %p84 = scmp.ne.s32.totalorder %s79, %s81
    %p85 = scmp.eq.s32.totalorder %s10, 0
    %p86 = por %p84, %p85
    %p87 = scmp.ne.s32.totalorder %s79, %s81
    %p88 = scmp.eq.s32.totalorder %s15, 1
    %p89 = por %p87, %p88
    %p90 = scmp.ne.s32.totalorder %s81, %s82
    %p91 = scmp.eq.s32.totalorder %s15, 0
    %p92 = por %p90, %p91
    %p93 = scmp.ne.s32.totalorder %s81, %s82
    %p94 = scmp.eq.s32.totalorder %s16, 1
    %p95 = por %p93, %p94
    %p97 = scmp.ne.s32.totalorder %s82, %s96
    %p98 = scmp.eq.s32.totalorder %s16, 0
    %p99 = por %p97, %p98
    %s101 = sadd.s32 %s100, 1
    %p104 = scmp.eq.s32.totalorder %s10, 1
    %p105 = scmp.ne.s32.totalorder %s100, %s102
    %p106 = scmp.eq.s32.totalorder %s10, 0
    %p107 = por %p105, %p106
    %p108 = scmp.ne.s32.totalorder %s100, %s102
    %p109 = scmp.eq.s32.totalorder %s15, 1
    %p110 = por %p108, %p109
    %p111 = scmp.ne.s32.totalorder %s102, %s103
    %p112 = scmp.eq.s32.totalorder %s15, 0
    %p113 = por %p111, %p112
    %p114 = scmp.ne.s32.totalorder %s102, %s103
    %p115 = scmp.eq.s32.totalorder %s16, 1
    %p116 = por %p114, %p115
    %p118 = scmp.ne.s32.totalorder %s103, %s117
    %p119 = scmp.eq.s32.totalorder %s16, 0
    %p120 = por %p118, %p119
    %s121 = ssub.s32 %s17, %s29
    %s122 = ssub.s32 %s18, %s25
    %s123 = sor.u32 %s121, %s122
    %p124 = scmp.eq.s32.totalorder %s123, 0
    %s126 = sadd.s32 %s125, 1
    %s127 = scalar_select %p124, %s125, %s126
    %p130 = pneg %p124
    %p131 = scmp.eq.s32.totalorder %s10, 1
    %p132 = por %p130, %p131
    %p133 = scmp.ne.s32.totalorder %s125, %s128
    %p134 = scmp.eq.s32.totalorder %s10, 0
    %p135 = por %p133, %p134
    %p136 = scmp.ne.s32.totalorder %s125, %s128
    %p137 = scmp.eq.s32.totalorder %s15, 1
    %p138 = por %p136, %p137
    %p139 = scmp.ne.s32.totalorder %s128, %s129
    %p140 = scmp.eq.s32.totalorder %s15, 0
    %p141 = por %p139, %p140
    %p142 = scmp.ne.s32.totalorder %s128, %s129
    %p143 = scmp.eq.s32.totalorder %s16, 1
    %p144 = por %p142, %p143
    %p146 = scmp.ne.s32.totalorder %s129, %s145
    %p147 = scmp.eq.s32.totalorder %s16, 0
    %p148 = por %p146, %p147
    %p149 = scmp.le.s32.totalorder 1, %s10
    %p150 = scmp.lt.s32.totalorder %s10, 3
    %p151 = pnand %p149, %p150
    %p152 = pneg %p151
    // Predicated region
    $region9: #{conv1x1_block_forward.3} parent=5 // pred_check
      _
    $region10: #{conv1x1_block_forward.3} parent=5 // pred_check_branch
      %154 = sbr.rel (%p151) target = $region12
    $region11: #{conv1x1_block_forward.3} parent=5 // pred_region
      %s155 = ssub.s32 %s10, 1
      // Predicated region
      $region13: #{conv1x1_block_forward.3} parent=11 // pred_check
        %p156 = pneg %p71
      $region14: #{conv1x1_block_forward.3} parent=11 // pred_check_branch
        %158 = sbr.rel (%p156) target = $region16
      $region15: #{conv1x1_block_forward.3} parent=11 // pred_region
        _
      $region16: #{conv1x1_block_forward.3} parent=11 // pred_fallthru
        _
      // Predicated region
      $region17: #{conv1x1_block_forward.3} parent=11 // pred_check
        %p159 = pneg %p92
      $region18: #{conv1x1_block_forward.3} parent=11 // pred_check_branch
        %161 = sbr.rel (%p159) target = $region20
      $region19: #{conv1x1_block_forward.3} parent=11 // pred_region
        _
      $region20: #{conv1x1_block_forward.3} parent=11 // pred_fallthru
        _
      // Predicated region
      $region21: #{conv1x1_block_forward.3} parent=11 // pred_check
        %p162 = pneg %p113
      $region22: #{conv1x1_block_forward.3} parent=11 // pred_check_branch
        %164 = sbr.rel (%p162) target = $region24
      $region23: #{conv1x1_block_forward.3} parent=11 // pred_region
        _
      $region24: #{conv1x1_block_forward.3} parent=11 // pred_fallthru
        _
    $region12: #{conv1x1_block_forward.3} parent=5 // pred_fallthru
      _
    %p165 = scmp.lt.s32.totalorder %s10, 2
    // Predicated region
    $region25: #{conv1x1_block_forward.3} parent=5 // pred_check
      %p166 = pneg %p165
    $region26: #{conv1x1_block_forward.3} parent=5 // pred_check_branch
      %168 = sbr.rel (%p166) target = $region28
    $region27: #{conv1x1_block_forward.3} parent=5 // pred_region
      // Predicated region
      $region29: #{conv1x1_block_forward.3} parent=27 // pred_check
        %p169 = pneg %p44
      $region30: #{conv1x1_block_forward.3} parent=27 // pred_check_branch
        %171 = sbr.rel (%p169) target = $region32
      $region31: #{conv1x1_block_forward.3} parent=27 // pred_region
        %s172 = smul.u32 3, %s18
        %p173 = scmp.lt.s32.totalorder %s17, 1
        %s174 = scalar_select %p173, %s17, 1
        %p175 = scmp.lt.s32.totalorder %s172, 2
        %s176 = scalar_select %p175, %s172, 2
        %s177 = smul.addr %s174, 3
        %s178 = sadd.s32 %s176, %s177
        %s179 = smul.addr %s178, 4
        %s180 = scalar_lea.vmem %s0, %s179
        %s181 = smul.u32 3, %s18
      $region32: #{conv1x1_block_forward.3} parent=27 // pred_fallthru
        _
    $region28: #{conv1x1_block_forward.3} parent=5 // pred_fallthru
      _
    %p182 = scmp.le.s32.totalorder 1, %s10
    %p183 = scmp.lt.s32.totalorder %s10, 3
    %p184 = pnand %p182, %p183
    %p185 = pneg %p184
    // Predicated region
    $region33: #{conv1x1_block_forward.3} parent=5 // pred_check
      _
    $region34: #{conv1x1_block_forward.3} parent=5 // pred_check_branch
      %187 = sbr.rel (%p184) target = $region36
    $region35: #{conv1x1_block_forward.3} parent=5 // pred_region
      %s188 = ssub.s32 %s10, 1
      %s189 = smul.u32 3, %s20
      %p190 = scmp.lt.s32.totalorder %s19, 1
      %s191 = scalar_select %p190, %s19, 1
      %p192 = scmp.lt.s32.totalorder %s189, 2
      %s193 = scalar_select %p192, %s189, 2
      %s194 = smul.addr %s191, 3
      %s195 = sadd.s32 %s193, %s194
      %s196 = smul.addr %s195, 4
      %s197 = scalar_lea.vmem %s0, %s196
      %p198 = pneg %p50
      %p199 = pneg %p47
      %p200 = pneg %p71
      %p201 = pneg %p68
      %p202 = pneg %p92
      %p203 = pneg %p89
      %p204 = pneg %p113
      %p205 = pneg %p110
      %p206 = pneg %p141
      %p207 = pneg %p138
      %s208 = smul.u32 3, %s20
      %p209 = scmp.lt.s32.totalorder %s19, 1
      %s210 = scalar_select %p209, %s19, 1
      %p211 = scmp.lt.s32.totalorder %s208, 2
      %s212 = scalar_select %p211, %s208, 2
      %s213 = smul.addr %s210, 3
      %s214 = sadd.s32 %s212, %s213
      %s215 = smul.addr %s214, 8
      %s216 = scalar_lea.vmem %s4, %s215
      %s217 = smul.u32 3, %s20
      %p218 = scmp.lt.s32.totalorder %s19, 1
      %s219 = scalar_select %p218, %s19, 1
      %p220 = scmp.lt.s32.totalorder %s217, 2
      %s221 = scalar_select %p220, %s217, 2
      %s222 = smul.addr %s219, 3
      %s223 = sadd.s32 %s221, %s222
      %s224 = smul.addr %s223, 4
      %s225 = scalar_lea.vmem %s0, %s224
      %s226 = smul.u32 3, %s20
      %s227 = smul.u32 3, %s20
      %p228 = scmp.lt.s32.totalorder %s19, 1
      %s229 = scalar_select %p228, %s19, 1
      %p230 = scmp.lt.s32.totalorder %s227, 2
      %s231 = scalar_select %p230, %s227, 2
      %s232 = smul.addr %s229, 3
      %s233 = sadd.s32 %s231, %s232
      %s234 = smul.addr %s233, 8
      %s235 = scalar_lea.vmem %s4, %s234
      %s236 = smul.u32 3, %s20
      %v237 = vld [vmem:[%s1] sm:$0xff]
      %v238 = vld [vmem:[%s225] sm:$0xff]
      %v239 = vld [vmem:[%s225 + $0x8] sm:$0xf]
      %v242 = vcombine.high %v238, %v238
      %vm243 = vcmask 31744
      %v245 = vsel %vm243, %v237, 0
      %vm247 = vcmask 1043456
      %v248 = vsel %vm247, %v238, 0
      %v250 = vsel %vm247, %v242, 0
      %v252 = vsel %vm247, %v239, 0
      %254 = vmatprep.subr.mxu0 0.0
      %255 = vmatpush1.msra.mxu0 0.0
      %256 = vmatprep.subr.mxu0 0.0
      %257 = vmatpush1.msra.mxu0 0.0
      %258 = vmatprep.subr.mxu0 0.0
      %259 = vmatpush1.msra.mxu0 0.0
      %260 = vmatprep.subr.mxu0 0.0
      %261 = vmatpush1.msra.mxu0 0.0
      %262 = vmatprep.subr.mxu0 0.0
      %263 = vmatpush1.msra.mxu0 0.0
      %264 = vmatprep.subr.mxu0 0.0
      %265 = vmatpush1.msra.mxu0 0.0
      %266 = vmatprep.subr.mxu0 0.0
      %267 = vmatpush1.msra.mxu0 0.0
      %268 = vmatprep.subr.mxu0 0.0
      %269 = vmatpush1.msra.mxu0 0.0
      %270 = vmatprep.subr.mxu0 0.0
      %271 = vmatpush1.msra.mxu0 0.0
      %272 = vmatprep.subr.mxu0 0.0
      %273 = vmatpush1.msra.mxu0 0.0
      %274 = vmatprep.subr.mxu0 0.0
      %275 = vmatpush1.msra.mxu0 0.0
      %276 = vmatprep.subr.mxu0 0.0
      %277 = vmatpush1.msra.mxu0 0.0
      %278 = vmatprep.subr.mxu0 0.0
      %279 = vmatpush1.msra.mxu0 0.0
      %280 = vmatprep.subr.mxu0 0.0
      %281 = vmatpush1.msra.mxu0 0.0
      %282 = vmatprep.subr.mxu0 0.0
      %283 = vmatpush1.msra.mxu0 0.0
      %284 = vmatprep.subr.mxu0 %v250
      %285 = vmatpush1.msra.mxu0 %v248
      %286 = vmatprep.subr.mxu0 0.0
      %287 = vmatpush2.msra.mxu0 0.0
      %288 = vmatprep.subr.mxu0 0.0
      %289 = vmatpush2.msra.mxu0 0.0
      %290 = vmatprep.subr.mxu0 0.0
      %291 = vmatpush2.msra.mxu0 0.0
      %292 = vmatprep.subr.mxu0 0.0
      %293 = vmatpush2.msra.mxu0 0.0
      %294 = vmatprep.subr.mxu0 0.0
      %295 = vmatpush2.msra.mxu0 0.0
      %296 = vmatprep.subr.mxu0 0.0
      %297 = vmatpush2.msra.mxu0 0.0
      %298 = vmatprep.subr.mxu0 0.0
      %299 = vmatpush2.msra.mxu0 0.0
      %300 = vmatprep.subr.mxu0 0.0
      %301 = vmatpush2.msra.mxu0 0.0
      %302 = vmatprep.subr.mxu0 0.0
      %303 = vmatpush2.msra.mxu0 0.0
      %304 = vmatprep.subr.mxu0 0.0
      %305 = vmatpush2.msra.mxu0 0.0
      %306 = vmatprep.subr.mxu0 0.0
      %307 = vmatpush2.msra.mxu0 0.0
      %308 = vmatprep.subr.mxu0 0.0
      %309 = vmatpush2.msra.mxu0 0.0
      %310 = vmatprep.subr.mxu0 0.0
      %311 = vmatpush2.msra.mxu0 0.0
      %312 = vmatprep.subr.mxu0 0.0
      %313 = vmatpush2.msra.mxu0 0.0
      %314 = vmatprep.subr.mxu0 0.0
      %315 = vmatpush2.msra.mxu0 0.0
      %316 = vmatprep.subr.mxu0 0.0
      %317 = vmatpush2.msra.mxu0 0.0
      %318 = vmatprep.mubr.f32.mxu0 0.0
      %319 = vmatmul.mubr.f32.gmra.mxu0 %v245
      %v320 = vpop.f32.mrf.mxu0
      %v321 = vadd.f32 0.0, %v320
      %v322 = vpop.f32.mrf.mxu0
      %v323 = vadd.f32 0.0, %v322
      %324 = vdwg.mxu0
      %325 = vmatprep.subr.mxu0 0.0
      %326 = vmatpush1.msra.mxu0 0.0
      %327 = vmatprep.subr.mxu0 0.0
      %328 = vmatpush1.msra.mxu0 0.0
      %329 = vmatprep.subr.mxu0 0.0
      %330 = vmatpush1.msra.mxu0 0.0
      %331 = vmatprep.subr.mxu0 0.0
      %332 = vmatpush1.msra.mxu0 0.0
      %333 = vmatprep.subr.mxu0 0.0
      %334 = vmatpush1.msra.mxu0 0.0
      %335 = vmatprep.subr.mxu0 0.0
      %336 = vmatpush1.msra.mxu0 0.0
      %337 = vmatprep.subr.mxu0 0.0
      %338 = vmatpush1.msra.mxu0 0.0
      %339 = vmatprep.subr.mxu0 0.0
      %340 = vmatpush1.msra.mxu0 0.0
      %341 = vmatprep.subr.mxu0 0.0
      %342 = vmatpush1.msra.mxu0 0.0
      %343 = vmatprep.subr.mxu0 0.0
      %344 = vmatpush1.msra.mxu0 0.0
      %345 = vmatprep.subr.mxu0 0.0
      %346 = vmatpush1.msra.mxu0 0.0
      %347 = vmatprep.subr.mxu0 0.0
      %348 = vmatpush1.msra.mxu0 0.0
      %349 = vmatprep.subr.mxu0 0.0
      %350 = vmatpush1.msra.mxu0 0.0
      %351 = vmatprep.subr.mxu0 0.0
      %352 = vmatpush1.msra.mxu0 0.0
      %353 = vmatprep.subr.mxu0 0.0
      %354 = vmatpush1.msra.mxu0 0.0
      %355 = vmatprep.subr.mxu0 0.0
      %356 = vmatpush1.msra.mxu0 %v252
      %357 = vmatprep.subr.mxu0 0.0
      %358 = vmatpush2.msra.mxu0 0.0
      %359 = vmatprep.subr.mxu0 0.0
      %360 = vmatpush2.msra.mxu0 0.0
      %361 = vmatprep.subr.mxu0 0.0
      %362 = vmatpush2.msra.mxu0 0.0
      %363 = vmatprep.subr.mxu0 0.0
      %364 = vmatpush2.msra.mxu0 0.0
      %365 = vmatprep.subr.mxu0 0.0
      %366 = vmatpush2.msra.mxu0 0.0
      %367 = vmatprep.subr.mxu0 0.0
      %368 = vmatpush2.msra.mxu0 0.0
      %369 = vmatprep.subr.mxu0 0.0
      %370 = vmatpush2.msra.mxu0 0.0
      %371 = vmatprep.subr.mxu0 0.0
      %372 = vmatpush2.msra.mxu0 0.0
      %373 = vmatprep.subr.mxu0 0.0
      %374 = vmatpush2.msra.mxu0 0.0
      %375 = vmatprep.subr.mxu0 0.0
      %376 = vmatpush2.msra.mxu0 0.0
      %377 = vmatprep.subr.mxu0 0.0
      %378 = vmatpush2.msra.mxu0 0.0
      %379 = vmatprep.subr.mxu0 0.0
      %380 = vmatpush2.msra.mxu0 0.0
      %381 = vmatprep.subr.mxu0 0.0
      %382 = vmatpush2.msra.mxu0 0.0
      %383 = vmatprep.subr.mxu0 0.0
      %384 = vmatpush2.msra.mxu0 0.0
      %385 = vmatprep.subr.mxu0 0.0
      %386 = vmatpush2.msra.mxu0 0.0
      %387 = vmatprep.subr.mxu0 0.0
      %388 = vmatpush2.msra.mxu0 0.0
      %389 = vmatprep.mubr.f32.mxu0 0.0
      %390 = vmatmul.mubr.f32.gmra.mxu0 %v245
      %v391 = vpop.f32.mrf.mxu0
      %v392 = vadd.f32 0.0, %v391
      %v393 = vpop.f32.mrf.mxu0
      %394 = vdwg.mxu0
      %v395 = vld [vmem:[%s2] sm:$0xff]
      %397 = vset.pattern.permute.xlu0 0
      %398 = vperm.xlu0 %397, %v395
      %v399 = vpop.permute.xlu0 %398
      %v401 = vmul.f32 %v321, %v399
      %v402 = vmul.f32 %v323, %v399
      %v403 = vmul.f32 %v392, %v399
      %v404 = vld [vmem:[%s3] sm:$0xff]
      %406 = vset.pattern.permute.xlu0 0
      %407 = vperm.xlu0 %406, %v404
      %v408 = vpop.permute.xlu0 %407
      %v410 = vadd.f32 %v401, %v408
      %v411 = vadd.f32 %v402, %v408
      %v412 = vadd.f32 %v403, %v408
      %v413 = vmax.f32 %v410, 0.0
      %v414 = vmax.f32 %v411, 0.0
      %v415 = vmax.f32 %v412, 0.0
      %v416 = vmin.f32 %v413, 6.0
      %v417 = vmin.f32 %v414, 6.0
      %v418 = vmin.f32 %v415, 6.0
      %419 = vst [vmem:[%s235] sm:$0xff] %v416
      %420 = vst [vmem:[%s235 + $0x8] sm:$0xff] %v417
      %421 = vst [vmem:[%s235 + $0x10] sm:$0xff] %v418
      %s422 = smul.u32 3, %s20
      %p423 = scmp.lt.s32.totalorder %s19, 1
      %s424 = scalar_select %p423, %s19, 1
      %p425 = scmp.lt.s32.totalorder %s422, 2
      %s426 = scalar_select %p425, %s422, 2
      %s427 = smul.addr %s424, 3
      %s428 = sadd.s32 %s426, %s427
      %s429 = smul.addr %s428, 8
      %s430 = scalar_lea.vmem %s4, %s429
      // Predicated region
      $region37: #{conv1x1_block_forward.3} parent=35 // pred_check
        %p431 = pneg %p138
      $region38: #{conv1x1_block_forward.3} parent=35 // pred_check_branch
        %433 = sbr.rel (%p431) target = $region40
      $region39: #{conv1x1_block_forward.3} parent=35 // pred_region
        %s434 = smul.u32 3, %s20
      $region40: #{conv1x1_block_forward.3} parent=35 // pred_fallthru
        _
    $region36: #{conv1x1_block_forward.3} parent=5 // pred_fallthru
      _
    %p435 = scmp.le.s32.totalorder 2, %s10
    // Predicated region
    $region41: #{conv1x1_block_forward.3} parent=5 // pred_check
      %p436 = pneg %p435
    $region42: #{conv1x1_block_forward.3} parent=5 // pred_check_branch
      %438 = sbr.rel (%p436) target = $region44
    $region43: #{conv1x1_block_forward.3} parent=5 // pred_region
      %s439 = ssub.s32 %s10, 2
      // Predicated region
      $region45: #{conv1x1_block_forward.3} parent=43 // pred_check
        %p440 = pneg %p144
      $region46: #{conv1x1_block_forward.3} parent=43 // pred_check_branch
        %442 = sbr.rel (%p440) target = $region48
      $region47: #{conv1x1_block_forward.3} parent=43 // pred_region
        %s443 = smul.u32 3, %s22
        %p444 = scmp.lt.s32.totalorder %s21, 1
        %s445 = scalar_select %p444, %s21, 1
        %p446 = scmp.lt.s32.totalorder %s443, 2
        %s447 = scalar_select %p446, %s443, 2
        %s448 = smul.addr %s445, 3
        %s449 = sadd.s32 %s447, %s448
        %s450 = smul.addr %s449, 8
        %s451 = scalar_lea.vmem %s4, %s450
      $region48: #{conv1x1_block_forward.3} parent=43 // pred_fallthru
        _
    $region44: #{conv1x1_block_forward.3} parent=5 // pred_fallthru
      _
  $region6: #{conv1x1_block_forward.3} parent=0 // loop_footer
    %s14 = sadd.s32 1, %s10
  $region7: #{conv1x1_block_forward.3} parent=0 // loop_footer_branch
    %9 = sbr.rel target = $region3
  $region8: #{conv1x1_block_forward.3} parent=0 // loop_exit
    _

// kernel: conv1x1_block_forward.2
$region0: #{conv1x1_block_forward.2}
  #allocation0 [shape = 'u32[]', space=smem, size = 0x4, offset = 0x4, fixed_abs, tag = 'smem constant byte address 0x4 - core index']
  #allocation1 [shape = 'u32[144,128]{1,0:T(1,128)}', space=vmem, size = 0x12000, scoped, tag = 'internal scratch']
  #allocation2 [shape = 'f32[8,1]{1,0:T(8,128)}', space=vmem, size = 0x1000, scoped, tag = 'scratch operand']
  #allocation3 [shape = 'f32[8,1]{1,0:T(8,128)}', space=vmem, size = 0x1000, scoped, tag = 'scratch operand']
  %s0 = inlined_call_operand.vmem [shape: f32[2,4,384], index: 0, kind: input, shape index: {}]
  %s1 = inlined_call_operand.vmem [shape: f32[8,4], index: 1, kind: input, shape index: {}]
  %s2 = inlined_call_operand.vmem [shape: f32[2,8,1], index: 2, kind: output, shape index: {0}]
  %s3 = inlined_call_operand.vmem [shape: f32[2,8,1], index: 3, kind: output, shape index: {1}]
  %4 = xla_tuple %s2, %s3
  %s5 = sld [smem:[#allocation0]]
  $region57: #{conv1x1_block_forward.2} parent=0
    _
  %s7 = ssub.s32 1, %s5
  %s8 = scalar_select 0, %s7, %s5
  loop: start=0, step=1, limit=4
  $region2: #{conv1x1_block_forward.2} parent=0 // loop_pre_header
    _
  $region3: #{conv1x1_block_forward.2} parent=0 // loop_header
    %s10 = sphi 0, %s14
    %p11 = scmp.ge.s32.totalorder %s10, 4
    %s17 = sphi 0, %s29
    %s18 = sphi 0, %s25
    %s19 = sphi 0, %s17
    %s20 = sphi 0, %s18
    %s21 = sphi 0, %s19
    %s22 = sphi 0, %s20
    %s34 = sphi 0, %s36
    %s37 = sphi 0, %s34
    %s38 = sphi 0, %s37
    %s54 = sphi 0, %s38
    %s58 = sphi 0, %s58
    %s60 = sphi 0, %s58
    %s61 = sphi 0, %s60
    %s75 = sphi 0, %s61
    %s81 = sphi 0, %s83
    %s84 = sphi 0, %s81
    %s85 = sphi 0, %s84
    %s101 = sphi 0, %s85
    %s107 = sphi 0, %s109
    %s110 = sphi 0, %s107
    %s111 = sphi 0, %s110
    %s127 = sphi 0, %s111
  $region4: #{conv1x1_block_forward.2} parent=0 // loop_header_branch
    %13 = sbr.rel (%p11) target = $region8
  $region5: #{conv1x1_block_forward.2} parent=0 // loop_body
    %s15 = ssub.s32 %s10, 1
    %s16 = ssub.s32 %s10, 2
    %s23 = sadd.s32 1, %s18
    %p24 = scmp.ge.s32.totalorder %s23, 1
    %s25 = scalar_select %p24, 0, %s23
    %s26 = sadd.s32 1, %s17
    %s27 = scalar_select %p24, %s26, %s17
    %p28 = scmp.ge.s32.totalorder %s27, 2
    %s29 = scalar_select %p28, 0, %s27
    %s30 = ssub.s32 %s17, %s29
    %s31 = ssub.s32 %s18, %s25
    %s32 = sor.u32 %s30, %s31
    %p33 = scmp.eq.s32.totalorder %s32, 0
    %s35 = sadd.s32 %s34, 1
    %s36 = scalar_select %p33, %s34, %s35
    %p39 = pneg %p33
    %p40 = scmp.eq.s32.totalorder %s10, 1
    %p41 = por %p39, %p40
    %p42 = scmp.ne.s32.totalorder %s34, %s37
    %p43 = scmp.eq.s32.totalorder %s10, 0
    %p44 = por %p42, %p43
    %p45 = scmp.ne.s32.totalorder %s34, %s37
    %p46 = scmp.eq.s32.totalorder %s15, 1
    %p47 = por %p45, %p46
    %p48 = scmp.ne.s32.totalorder %s37, %s38
    %p49 = scmp.eq.s32.totalorder %s15, 0
    %p50 = por %p48, %p49
    %p51 = scmp.ne.s32.totalorder %s37, %s38
    %p52 = scmp.eq.s32.totalorder %s16, 1
    %p53 = por %p51, %p52
    %p55 = scmp.ne.s32.totalorder %s38, %s54
    %p56 = scmp.eq.s32.totalorder %s16, 0
    %p57 = por %p55, %p56
    %s59 = sadd.s32 %s58, 1
    %p62 = scmp.eq.s32.totalorder %s10, 1
    %p63 = scmp.ne.s32.totalorder %s58, %s60
    %p64 = scmp.eq.s32.totalorder %s10, 0
    %p65 = por %p63, %p64
    %p66 = scmp.ne.s32.totalorder %s58, %s60
    %p67 = scmp.eq.s32.totalorder %s15, 1
    %p68 = por %p66, %p67
    %p69 = scmp.ne.s32.totalorder %s60, %s61
    %p70 = scmp.eq.s32.totalorder %s15, 0
    %p71 = por %p69, %p70
    %p72 = scmp.ne.s32.totalorder %s60, %s61
    %p73 = scmp.eq.s32.totalorder %s16, 1
    %p74 = por %p72, %p73
    %p76 = scmp.ne.s32.totalorder %s61, %s75
    %p77 = scmp.eq.s32.totalorder %s16, 0
    %p78 = por %p76, %p77
    %s79 = ssub.s32 %s17, %s29
    %p80 = scmp.eq.s32.totalorder %s79, 0
    %s82 = sadd.s32 %s81, 1
    %s83 = scalar_select %p80, %s81, %s82
    %p86 = pneg %p80
    %p87 = scmp.eq.s32.totalorder %s10, 1
    %p88 = por %p86, %p87
    %p89 = scmp.ne.s32.totalorder %s81, %s84
    %p90 = scmp.eq.s32.totalorder %s10, 0
    %p91 = por %p89, %p90
    %p92 = scmp.ne.s32.totalorder %s81, %s84
    %p93 = scmp.eq.s32.totalorder %s15, 1
    %p94 = por %p92, %p93
    %p95 = scmp.ne.s32.totalorder %s84, %s85
    %p96 = scmp.eq.s32.totalorder %s15, 0
    %p97 = por %p95, %p96
    %p98 = scmp.ne.s32.totalorder %s84, %s85
    %p99 = scmp.eq.s32.totalorder %s16, 1
    %p100 = por %p98, %p99
    %p102 = scmp.ne.s32.totalorder %s85, %s101
    %p103 = scmp.eq.s32.totalorder %s16, 0
    %p104 = por %p102, %p103
    %s105 = ssub.s32 %s17, %s29
    %p106 = scmp.eq.s32.totalorder %s105, 0
    %s108 = sadd.s32 %s107, 1
    %s109 = scalar_select %p106, %s107, %s108
    %p112 = pneg %p106
    %p113 = scmp.eq.s32.totalorder %s10, 1
    %p114 = por %p112, %p113
    %p115 = scmp.ne.s32.totalorder %s107, %s110
    %p116 = scmp.eq.s32.totalorder %s10, 0
    %p117 = por %p115, %p116
    %p118 = scmp.ne.s32.totalorder %s107, %s110
    %p119 = scmp.eq.s32.totalorder %s15, 1
    %p120 = por %p118, %p119
    %p121 = scmp.ne.s32.totalorder %s110, %s111
    %p122 = scmp.eq.s32.totalorder %s15, 0
    %p123 = por %p121, %p122
    %p124 = scmp.ne.s32.totalorder %s110, %s111
    %p125 = scmp.eq.s32.totalorder %s16, 1
    %p126 = por %p124, %p125
    %p128 = scmp.ne.s32.totalorder %s111, %s127
    %p129 = scmp.eq.s32.totalorder %s16, 0
    %p130 = por %p128, %p129
    %p131 = scmp.le.s32.totalorder 1, %s10
    %p132 = scmp.lt.s32.totalorder %s10, 3
    %p133 = pnand %p131, %p132
    %p134 = pneg %p133
    // Predicated region
    $region9: #{conv1x1_block_forward.2} parent=5 // pred_check
      _
    $region10: #{conv1x1_block_forward.2} parent=5 // pred_check_branch
      %136 = sbr.rel (%p133) target = $region12
    $region11: #{conv1x1_block_forward.2} parent=5 // pred_region
      %s137 = ssub.s32 %s10, 1
      // Predicated region
      $region13: #{conv1x1_block_forward.2} parent=11 // pred_check
        %p138 = pneg %p71
      $region14: #{conv1x1_block_forward.2} parent=11 // pred_check_branch
        %140 = sbr.rel (%p138) target = $region16
      $region15: #{conv1x1_block_forward.2} parent=11 // pred_region
        _
      $region16: #{conv1x1_block_forward.2} parent=11 // pred_fallthru
        _
    $region12: #{conv1x1_block_forward.2} parent=5 // pred_fallthru
      _
    %p141 = scmp.lt.s32.totalorder %s10, 2
    // Predicated region
    $region17: #{conv1x1_block_forward.2} parent=5 // pred_check
      %p142 = pneg %p141
    $region18: #{conv1x1_block_forward.2} parent=5 // pred_check_branch
      %144 = sbr.rel (%p142) target = $region20
    $region19: #{conv1x1_block_forward.2} parent=5 // pred_region
      // Predicated region
      $region21: #{conv1x1_block_forward.2} parent=19 // pred_check
        %p145 = pneg %p44
      $region22: #{conv1x1_block_forward.2} parent=19 // pred_check_branch
        %147 = sbr.rel (%p145) target = $region24
      $region23: #{conv1x1_block_forward.2} parent=19 // pred_region
        %s148 = smul.u32 3, %s18
        %p149 = scmp.lt.s32.totalorder %s17, 1
        %s150 = scalar_select %p149, %s17, 1
        %p151 = scmp.lt.s32.totalorder %s148, 2
        %s152 = scalar_select %p151, %s148, 2
        %s153 = smul.addr %s150, 3
        %s154 = sadd.s32 %s152, %s153
        %s155 = smul.addr %s154, 4
        %s156 = scalar_lea.vmem %s0, %s155
        %s157 = smul.u32 3, %s18
      $region24: #{conv1x1_block_forward.2} parent=19 // pred_fallthru
        _
    $region20: #{conv1x1_block_forward.2} parent=5 // pred_fallthru
      _
    %p158 = scmp.le.s32.totalorder 1, %s10
    %p159 = scmp.lt.s32.totalorder %s10, 3
    %p160 = pnand %p158, %p159
    %p161 = pneg %p160
    // Predicated region
    $region25: #{conv1x1_block_forward.2} parent=5 // pred_check
      _
    $region26: #{conv1x1_block_forward.2} parent=5 // pred_check_branch
      %163 = sbr.rel (%p160) target = $region28
    $region27: #{conv1x1_block_forward.2} parent=5 // pred_region
      %s164 = ssub.s32 %s10, 1
      %s165 = smul.u32 3, %s20
      %p166 = scmp.lt.s32.totalorder %s19, 1
      %s167 = scalar_select %p166, %s19, 1
      %p168 = scmp.lt.s32.totalorder %s165, 2
      %s169 = scalar_select %p168, %s165, 2
      %s170 = smul.addr %s167, 3
      %s171 = sadd.s32 %s169, %s170
      %s172 = smul.addr %s171, 4
      %s173 = scalar_lea.vmem %s0, %s172
      %p174 = pneg %p50
      %p175 = pneg %p47
      %p176 = pneg %p71
      %p177 = pneg %p68
      %p178 = pneg %p97
      %p179 = pneg %p94
      %p180 = scmp.lt.s32.totalorder %s19, 1
      %s181 = scalar_select %p180, %s19, 1
      %s182 = smul.addr %s181, 8
      %s183 = scalar_lea.vmem %s2, %s182
      %p184 = pneg %p123
      %p185 = pneg %p120
      %p186 = scmp.lt.s32.totalorder %s19, 1
      %s187 = scalar_select %p186, %s19, 1
      %s188 = smul.addr %s187, 8
      %s189 = scalar_lea.vmem %s3, %s188
      %s190 = smul.u32 3, %s20
      %p191 = scmp.lt.s32.totalorder %s19, 1
      %s192 = scalar_select %p191, %s19, 1
      %p193 = scmp.lt.s32.totalorder %s190, 2
      %s194 = scalar_select %p193, %s190, 2
      %s195 = smul.addr %s192, 3
      %s196 = sadd.s32 %s194, %s195
      %s197 = smul.addr %s196, 4
      %s198 = scalar_lea.vmem %s0, %s197
      %s199 = smul.u32 3, %s20
      %p200 = scmp.lt.s32.totalorder %s19, 1
      %s201 = scalar_select %p200, %s19, 1
      %s202 = smul.addr %s201, 8
      %s203 = scalar_lea.vmem %s2, %s202
      %p204 = scmp.lt.s32.totalorder %s19, 1
      %s205 = scalar_select %p204, %s19, 1
      %s206 = smul.addr %s205, 8
      %s207 = scalar_lea.vmem %s3, %s206
      %p208 = scmp.eq.s32.totalorder %s20, 0
      // Predicated region
      $region29: #{conv1x1_block_forward.2} parent=27 // pred_check
        %p209 = pneg %p208
      $region30: #{conv1x1_block_forward.2} parent=27 // pred_check_branch
        %211 = sbr.rel (%p209) target = $region32
      $region31: #{conv1x1_block_forward.2} parent=27 // pred_region
        %vm212 = vcmask 7168
        %213 = vst.msk [vmem:[#allocation2] sm:$0xff] %vm212, 0.0
        %214 = vst.msk [vmem:[#allocation3] sm:$0xff] %vm212, 0.0
      $region32: #{conv1x1_block_forward.2} parent=27 // pred_fallthru
        _
      %v215 = vld [vmem:[%s1] sm:$0xff]
      %v216 = vld [vmem:[%s198] sm:$0xff]
      %v217 = vld [vmem:[%s198 + $0x8] sm:$0xf]
      %v220 = vcombine.high %v216, %v216
      %vm221 = vcmask 31744
      %v223 = vsel %vm221, %v215, 0
      %vm225 = vcmask 1043456
      %v226 = vsel %vm225, %v216, 0
      %v228 = vsel %vm225, %v220, 0
      %v230 = vsel %vm225, %v217, 0
      %232 = vmatprep.subr.mxu0 0.0
      %233 = vmatpush1.msra.mxu0 0.0
      %234 = vmatprep.subr.mxu0 0.0
      %235 = vmatpush1.msra.mxu0 0.0
      %236 = vmatprep.subr.mxu0 0.0
      %237 = vmatpush1.msra.mxu0 0.0
      %238 = vmatprep.subr.mxu0 0.0
      %239 = vmatpush1.msra.mxu0 0.0
      %240 = vmatprep.subr.mxu0 0.0
      %241 = vmatpush1.msra.mxu0 0.0
      %242 = vmatprep.subr.mxu0 0.0
      %243 = vmatpush1.msra.mxu0 0.0
      %244 = vmatprep.subr.mxu0 0.0
      %245 = vmatpush1.msra.mxu0 0.0
      %246 = vmatprep.subr.mxu0 0.0
      %247 = vmatpush1.msra.mxu0 0.0
      %248 = vmatprep.subr.mxu0 0.0
      %249 = vmatpush1.msra.mxu0 0.0
      %250 = vmatprep.subr.mxu0 0.0
      %251 = vmatpush1.msra.mxu0 0.0
      %252 = vmatprep.subr.mxu0 0.0
      %253 = vmatpush1.msra.mxu0 0.0
      %254 = vmatprep.subr.mxu0 0.0
      %255 = vmatpush1.msra.mxu0 0.0
      %256 = vmatprep.subr.mxu0 0.0
      %257 = vmatpush1.msra.mxu0 0.0
      %258 = vmatprep.subr.mxu0 0.0
      %259 = vmatpush1.msra.mxu0 0.0
      %260 = vmatprep.subr.mxu0 0.0
      %261 = vmatpush1.msra.mxu0 0.0
      %262 = vmatprep.subr.mxu0 %v228
      %263 = vmatpush1.msra.mxu0 %v226
      %264 = vmatprep.subr.mxu0 0.0
      %265 = vmatpush2.msra.mxu0 0.0
      %266 = vmatprep.subr.mxu0 0.0
      %267 = vmatpush2.msra.mxu0 0.0
      %268 = vmatprep.subr.mxu0 0.0
      %269 = vmatpush2.msra.mxu0 0.0
      %270 = vmatprep.subr.mxu0 0.0
      %271 = vmatpush2.msra.mxu0 0.0
      %272 = vmatprep.subr.mxu0 0.0
      %273 = vmatpush2.msra.mxu0 0.0
      %274 = vmatprep.subr.mxu0 0.0
      %275 = vmatpush2.msra.mxu0 0.0
      %276 = vmatprep.subr.mxu0 0.0
      %277 = vmatpush2.msra.mxu0 0.0
      %278 = vmatprep.subr.mxu0 0.0
      %279 = vmatpush2.msra.mxu0 0.0
      %280 = vmatprep.subr.mxu0 0.0
      %281 = vmatpush2.msra.mxu0 0.0
      %282 = vmatprep.subr.mxu0 0.0
      %283 = vmatpush2.msra.mxu0 0.0
      %284 = vmatprep.subr.mxu0 0.0
      %285 = vmatpush2.msra.mxu0 0.0
      %286 = vmatprep.subr.mxu0 0.0
      %287 = vmatpush2.msra.mxu0 0.0
      %288 = vmatprep.subr.mxu0 0.0
      %289 = vmatpush2.msra.mxu0 0.0
      %290 = vmatprep.subr.mxu0 0.0
      %291 = vmatpush2.msra.mxu0 0.0
      %292 = vmatprep.subr.mxu0 0.0
      %293 = vmatpush2.msra.mxu0 0.0
      %294 = vmatprep.subr.mxu0 0.0
      %295 = vmatpush2.msra.mxu0 0.0
      %296 = vmatprep.mubr.f32.mxu0 0.0
      %297 = vmatmul.mubr.f32.gmra.mxu0 %v223
      %v298 = vpop.f32.mrf.mxu0
      %v299 = vadd.f32 0.0, %v298
      %v300 = vpop.f32.mrf.mxu0
      %v301 = vadd.f32 0.0, %v300
      %302 = vdwg.mxu0
      %303 = vmatprep.subr.mxu0 0.0
      %304 = vmatpush1.msra.mxu0 0.0
      %305 = vmatprep.subr.mxu0 0.0
      %306 = vmatpush1.msra.mxu0 0.0
      %307 = vmatprep.subr.mxu0 0.0
      %308 = vmatpush1.msra.mxu0 0.0
      %309 = vmatprep.subr.mxu0 0.0
      %310 = vmatpush1.msra.mxu0 0.0
      %311 = vmatprep.subr.mxu0 0.0
      %312 = vmatpush1.msra.mxu0 0.0
      %313 = vmatprep.subr.mxu0 0.0
      %314 = vmatpush1.msra.mxu0 0.0
      %315 = vmatprep.subr.mxu0 0.0
      %316 = vmatpush1.msra.mxu0 0.0
      %317 = vmatprep.subr.mxu0 0.0
      %318 = vmatpush1.msra.mxu0 0.0
      %319 = vmatprep.subr.mxu0 0.0
      %320 = vmatpush1.msra.mxu0 0.0
      %321 = vmatprep.subr.mxu0 0.0
      %322 = vmatpush1.msra.mxu0 0.0
      %323 = vmatprep.subr.mxu0 0.0
      %324 = vmatpush1.msra.mxu0 0.0
      %325 = vmatprep.subr.mxu0 0.0
      %326 = vmatpush1.msra.mxu0 0.0
      %327 = vmatprep.subr.mxu0 0.0
      %328 = vmatpush1.msra.mxu0 0.0
      %329 = vmatprep.subr.mxu0 0.0
      %330 = vmatpush1.msra.mxu0 0.0
      %331 = vmatprep.subr.mxu0 0.0
      %332 = vmatpush1.msra.mxu0 0.0
      %333 = vmatprep.subr.mxu0 0.0
      %334 = vmatpush1.msra.mxu0 %v230
      %335 = vmatprep.subr.mxu0 0.0
      %336 = vmatpush2.msra.mxu0 0.0
      %337 = vmatprep.subr.mxu0 0.0
      %338 = vmatpush2.msra.mxu0 0.0
      %339 = vmatprep.subr.mxu0 0.0
      %340 = vmatpush2.msra.mxu0 0.0
      %341 = vmatprep.subr.mxu0 0.0
      %342 = vmatpush2.msra.mxu0 0.0
      %343 = vmatprep.subr.mxu0 0.0
      %344 = vmatpush2.msra.mxu0 0.0
      %345 = vmatprep.subr.mxu0 0.0
      %346 = vmatpush2.msra.mxu0 0.0
      %347 = vmatprep.subr.mxu0 0.0
      %348 = vmatpush2.msra.mxu0 0.0
      %349 = vmatprep.subr.mxu0 0.0
      %350 = vmatpush2.msra.mxu0 0.0
      %351 = vmatprep.subr.mxu0 0.0
      %352 = vmatpush2.msra.mxu0 0.0
      %353 = vmatprep.subr.mxu0 0.0
      %354 = vmatpush2.msra.mxu0 0.0
      %355 = vmatprep.subr.mxu0 0.0
      %356 = vmatpush2.msra.mxu0 0.0
      %357 = vmatprep.subr.mxu0 0.0
      %358 = vmatpush2.msra.mxu0 0.0
      %359 = vmatprep.subr.mxu0 0.0
      %360 = vmatpush2.msra.mxu0 0.0
      %361 = vmatprep.subr.mxu0 0.0
      %362 = vmatpush2.msra.mxu0 0.0
      %363 = vmatprep.subr.mxu0 0.0
      %364 = vmatpush2.msra.mxu0 0.0
      %365 = vmatprep.subr.mxu0 0.0
      %366 = vmatpush2.msra.mxu0 0.0
      %367 = vmatprep.mubr.f32.mxu0 0.0
      %368 = vmatmul.mubr.f32.gmra.mxu0 %v223
      %v369 = vpop.f32.mrf.mxu0
      %v370 = vadd.f32 0.0, %v369
      %v371 = vpop.f32.mrf.mxu0
      %372 = vdwg.mxu0
      %v373 = vld [vmem:[#allocation2] sm:$0xff]
      %v374 = vadd.f32 %v299, %v301
      %v375 = vadd.f32 %v374, %v370
      %376 = vadd.xlane.f32.xlu0 %v375
      %v377 = vpop.xlane.xlu0 %376
      %v378 = vadd.f32 %v373, %v377
      %vm379 = vcmask 7168
      %380 = vst.msk [vmem:[#allocation2] sm:$0xff] %vm379, %v378
      %v381 = vld [vmem:[#allocation3] sm:$0xff]
      %v382 = vmul.f32 %v299, %v299
      %v383 = vmul.f32 %v301, %v301
      %v384 = vmul.f32 %v370, %v370
      %v385 = vadd.f32 %v382, %v383
      %v386 = vadd.f32 %v385, %v384
      %387 = vadd.xlane.f32.xlu0 %v386
      %v388 = vpop.xlane.xlu0 %387
      %v389 = vadd.f32 %v381, %v388
      %390 = vst.msk [vmem:[#allocation3] sm:$0xff] %vm379, %v389
      // Predicated region
      $region33: #{conv1x1_block_forward.2} parent=27 // pred_check
        %p391 = pneg %p208
      $region34: #{conv1x1_block_forward.2} parent=27 // pred_check_branch
        %393 = sbr.rel (%p391) target = $region36
      $region35: #{conv1x1_block_forward.2} parent=27 // pred_region
        %v394 = vld [vmem:[#allocation2] sm:$0xff]
        %395 = vst.msk [vmem:[%s203] sm:$0xff] %vm379, %v394
        %v396 = vld [vmem:[#allocation3] sm:$0xff]
        %397 = vst.msk [vmem:[%s207] sm:$0xff] %vm379, %v396
      $region36: #{conv1x1_block_forward.2} parent=27 // pred_fallthru
        _
      %p398 = scmp.lt.s32.totalorder %s19, 1
      %s399 = scalar_select %p398, %s19, 1
      %s400 = smul.addr %s399, 8
      %s401 = scalar_lea.vmem %s2, %s400
      %p402 = scmp.lt.s32.totalorder %s19, 1
      %s403 = scalar_select %p402, %s19, 1
      %s404 = smul.addr %s403, 8
      %s405 = scalar_lea.vmem %s3, %s404
      // Predicated region
      $region37: #{conv1x1_block_forward.2} parent=27 // pred_check
        %p406 = pneg %p94
      $region38: #{conv1x1_block_forward.2} parent=27 // pred_check_branch
        %408 = sbr.rel (%p406) target = $region40
      $region39: #{conv1x1_block_forward.2} parent=27 // pred_region
        _
      $region40: #{conv1x1_block_forward.2} parent=27 // pred_fallthru
        _
      // Predicated region
      $region41: #{conv1x1_block_forward.2} parent=27 // pred_check
        %p409 = pneg %p120
      $region42: #{conv1x1_block_forward.2} parent=27 // pred_check_branch
        %411 = sbr.rel (%p409) target = $region44
      $region43: #{conv1x1_block_forward.2} parent=27 // pred_region
        _
      $region44: #{conv1x1_block_forward.2} parent=27 // pred_fallthru
        _
    $region28: #{conv1x1_block_forward.2} parent=5 // pred_fallthru
      _
    %p412 = scmp.le.s32.totalorder 2, %s10
    // Predicated region
    $region45: #{conv1x1_block_forward.2} parent=5 // pred_check
      %p413 = pneg %p412
    $region46: #{conv1x1_block_forward.2} parent=5 // pred_check_branch
      %415 = sbr.rel (%p413) target = $region48
    $region47: #{conv1x1_block_forward.2} parent=5 // pred_region
      %s416 = ssub.s32 %s10, 2
      // Predicated region
      $region49: #{conv1x1_block_forward.2} parent=47 // pred_check
        %p417 = pneg %p100
      $region50: #{conv1x1_block_forward.2} parent=47 // pred_check_branch
        %419 = sbr.rel (%p417) target = $region52
      $region51: #{conv1x1_block_forward.2} parent=47 // pred_region
        %p420 = scmp.lt.s32.totalorder %s21, 1
        %s421 = scalar_select %p420, %s21, 1
        %s422 = smul.addr %s421, 8
        %s423 = scalar_lea.vmem %s2, %s422
      $region52: #{conv1x1_block_forward.2} parent=47 // pred_fallthru
        _
      // Predicated region
      $region53: #{conv1x1_block_forward.2} parent=47 // pred_check
        %p424 = pneg %p126
      $region54: #{conv1x1_block_forward.2} parent=47 // pred_check_branch
        %426 = sbr.rel (%p424) target = $region56
      $region55: #{conv1x1_block_forward.2} parent=47 // pred_region
        %p427 = scmp.lt.s32.totalorder %s21, 1
        %s428 = scalar_select %p427, %s21, 1
        %s429 = smul.addr %s428, 8
        %s430 = scalar_lea.vmem %s3, %s429
      $region56: #{conv1x1_block_forward.2} parent=47 // pred_fallthru
        _
    $region48: #{conv1x1_block_forward.2} parent=5 // pred_fallthru
      _
  $region6: #{conv1x1_block_forward.2} parent=0 // loop_footer
    %s14 = sadd.s32 1, %s10
  $region7: #{conv1x1_block_forward.2} parent=0 // loop_footer_branch
    %9 = sbr.rel target = $region3
  $region8: #{conv1x1_block_forward.2} parent=0 // loop_exit
    _

</llo_original>
